<compile_context>
chip_gen: v6e
topology: v6e:2x2x1
jax: 0.10.0
libtpu: 0.0.40
codegen_flags: <defaults>
</compile_context>

<pallas_src>
import jax
import jax.numpy as jnp
from jax.experimental import pallas as pl
from jax.experimental.pallas import tpu as pltpu


def _round_up(a, b):
    return ((a + b - 1) // b) * b


def _make_kernel(num_etypes, sep):
    def kernel(x_dst_ref, x_src_ref, bias_ref, out_ref, acc_ref):
        k = pl.program_id(1)                         # src-chunk (reduction) axis
        x_src = x_src_ref[...]                       # [TS, C] f32 source features

        # Per-edge-type maxima over this source chunk. Additive -inf bias:
        # masked[i, j, c] = x[j, c] + bias[i, j]  (bias = 0 on edges, -inf otherwise)
        chunk_max = []
        for e in range(num_etypes):                  # tiny static loop over etypes
            bias_e = bias_ref[e].astype(jnp.float32)             # [TN, TS]
            masked = x_src[None, :, :] + bias_e[:, :, None]      # [TN, TS, C]
            chunk_max.append(jnp.max(masked, axis=1))            # [TN, C]

        @pl.when(k == 0)
        def _():                                     # init running max
            for e in range(num_etypes):
                acc_ref[e] = chunk_max[e]

        @pl.when(k > 0)
        def _():                                     # accumulate running max
            for e in range(num_etypes):
                acc_ref[e] = jnp.maximum(acc_ref[e], chunk_max[e])

        # Finalize once per dst tile: zero out -inf (zero in-degree destinations),
        # concatenate the (sep + E) parts, one lane-dense store.
        @pl.when(k == pl.num_programs(1) - 1)
        def _():
            parts = []
            if sep:
                parts.append(x_dst_ref[...])
            for e in range(num_etypes):
                a = acc_ref[e]
                parts.append(jnp.where(a == -jnp.inf, 0.0, a))
            out_ref[...] = jnp.concatenate(parts, axis=-1).astype(out_ref.dtype)

    return kernel


def graph_max_aggregation(x, edge_indices, *, sep=True, tn=256, ts=512):
    """x: [N, C] node features. edge_indices: list of [2, E_e] (src, dst) int arrays,
    one per edge type. Returns [N, (sep + num_etypes) * C]."""
    N, C = x.shape
    E = len(edge_indices)
    out_c = (int(sep) + E) * C

    # ---- source (lane) chunking: full padded N if small, else 128-aligned chunks.
    if _round_up(N, 8) <= ts:
        TS = _round_up(N, 8)
        N_src = TS
    else:
        TS = max(128, (ts // 128) * 128)
        N_src = _round_up(N, TS)

    # ---- destination (sublane) tiling: as large as the [TN, TS, C] reduce
    #      intermediate allows (~8 MiB budget keeps v7x's 64 MiB VMEM safe).
    TN = min(_round_up(tn, 8), _round_up(N, 8))
    while TN > 8 and E * TN * TS * C * 4 > (8 << 20):
        TN //= 2
    TN = max(8, (TN // 8) * 8)
    N_dst = _round_up(N, TN)

    xf = x.astype(jnp.float32)
    x_dst = jnp.zeros((N_dst, C), jnp.float32).at[:N].set(xf)
    x_src = jnp.zeros((N_src, C), jnp.float32).at[:N].set(xf)

    # Additive bias "mask" in bf16: bias[e, dst, src] = 0 iff edge src->dst of
    # type e, else -inf (padded rows/cols stay -inf -> never win the max).
    # TODO(synk): dense [E, N, N] bias is O(N^2); large sparse graphs need a
    # CSR + scalar-prefetch gather kernel (changes asymptotics, not constants).
    bias = jnp.full((E, N_dst, N_src), -jnp.inf, jnp.bfloat16)
    for e, ei in enumerate(edge_indices):
        ei = jnp.asarray(ei, jnp.int32)
        bias = bias.at[e, ei[1], ei[0]].set(0.0)

    kernel = _make_kernel(E, sep)
    y = pl.pallas_call(
        kernel,
        out_shape=jax.ShapeDtypeStruct((N_dst, out_c), jnp.float32),
        grid=(N_dst // TN, N_src // TS),
        in_specs=[
            pl.BlockSpec((TN, C), lambda i, k: (i, 0)),          # dst-tile feats (sep)
            pl.BlockSpec((TS, C), lambda i, k: (k, 0)),          # src-chunk feats
            pl.BlockSpec((E, TN, TS), lambda i, k: (0, i, k)),   # bias tile
        ],
        out_specs=pl.BlockSpec((TN, out_c), lambda i, k: (i, 0)),
        scratch_shapes=[pltpu.VMEM((E, TN, C), jnp.float32)],    # running max acc
        compiler_params=pltpu.CompilerParams(
            dimension_semantics=("parallel", "arbitrary"),       # megacore on dst axis
            vmem_limit_bytes=48 * 1024 * 1024),
    )(x_dst, x_src, bias)
    return y[:N]


if __name__ == "__main__":
    N, C = 16, 32            # num_nodes, feature dim
    num_etypes = 3

    key = jax.random.PRNGKey(0)
    x = jax.random.normal(key, (N, C), jnp.float32)

    # Deterministic heterograph: three edge types over the same N nodes
    # (edge_index layout: row 0 = src, row 1 = dst).
    idx = jnp.arange(N, dtype=jnp.int32)
    nxt = (idx + 1) % N
    edge_indices = [
        jnp.stack([idx, nxt]),               # etype 0: forward ring
        jnp.stack([nxt, idx]),               # etype 1: backward ring
        jnp.stack([idx, idx % (N // 2)]),    # etype 2: only first N//2 nodes receive
    ]                                        #   -> zero-in-degree dsts hit isinf->0

    y = jax.block_until_ready(graph_max_aggregation(x, edge_indices, sep=True))

    # Pure-JAX reference with the original module semantics.
    masks = jnp.stack([jnp.zeros((N, N), jnp.float32).at[ei[1], ei[0]].set(1.0)
                       for ei in edge_indices])
    parts = [x]
    for e in range(num_etypes):
        masked = jnp.where(masks[e][:, :, None] > 0.5, x[None, :, :], -jnp.inf)
        parts.append(jnp.max(masked, axis=1))
    ref = jnp.concatenate(parts, axis=-1)
    ref = jnp.where(jnp.isinf(ref), 0.0, ref)

    assert y.shape == (N, (1 + num_etypes) * C), y.shape
    assert bool(jnp.all(jnp.isfinite(y)))
    assert bool(jnp.allclose(y, ref, atol=1e-6)), float(jnp.max(jnp.abs(y - ref)))
    print("KERNEL_OK")
</pallas_src>

<mosaic_0001>
module attributes {stable_mosaic.version = 11 : i64} {
  func.func @kernel(%arg0: i32, %arg1: i32, %arg2: memref<16x32xf32, #tpu.memory_space<vmem>>, %arg3: memref<16x32xf32, #tpu.memory_space<vmem>>, %arg4: memref<3x16x16xbf16, #tpu.memory_space<vmem>>, %arg5: memref<16x128xf32, #tpu.memory_space<vmem>>, %arg6: memref<3x16x32xf32, #tpu.memory_space<vmem>>) attributes {dimension_semantics = [#tpu.dimension_semantics<parallel>, #tpu.dimension_semantics<arbitrary>], iteration_bounds = array<i64: 1, 1>, scalar_prefetch = 0 : i64, scratch_operands = 1 : i64, tpu.core_type = #tpu.core_type<tc>, window_params = [{transform_indices = @transform_0, window_bounds = array<i64: 16, 32>}, {transform_indices = @transform_1, window_bounds = array<i64: 16, 32>}, {transform_indices = @transform_2, window_bounds = array<i64: 3, 16, 16>}, {transform_indices = @transform_3, window_bounds = array<i64: 16, 128>}]} {
    %c0 = arith.constant 0 : index
    %c0_0 = arith.constant 0 : index
    %0 = vector.load %arg3[%c0, %c0_0] : memref<16x32xf32, #tpu.memory_space<vmem>>, vector<16x32xf32>
    %c0_1 = arith.constant 0 : index
    %c0_2 = arith.constant 0 : index
    %c0_3 = arith.constant 0 : index
    %1 = vector.load %arg4[%c0_1, %c0_2, %c0_3] : memref<3x16x16xbf16, #tpu.memory_space<vmem>>, vector<1x16x16xbf16>
    %2 = vector.shape_cast %1 : vector<1x16x16xbf16> to vector<16x16xbf16>
    %3 = arith.extf %2 : vector<16x16xbf16> to vector<16x16xf32>
    %4 = vector.shape_cast %0 : vector<16x32xf32> to vector<1x16x32xf32>
    %5 = vector.shape_cast %3 : vector<16x16xf32> to vector<16x16x1xf32>
    %6 = vector.broadcast %4 : vector<1x16x32xf32> to vector<16x16x32xf32>
    %7 = vector.broadcast %5 : vector<16x16x1xf32> to vector<16x16x32xf32>
    %8 = arith.addf %6, %7 : vector<16x16x32xf32>
    %cst = arith.constant dense<0xFF800000> : vector<16x32xf32>
    %9 = vector.multi_reduction <maximumf>, %8, %cst [1] : vector<16x16x32xf32> to vector<16x32xf32>
    %c1 = arith.constant 1 : index
    %c0_4 = arith.constant 0 : index
    %c0_5 = arith.constant 0 : index
    %10 = vector.load %arg4[%c1, %c0_4, %c0_5] : memref<3x16x16xbf16, #tpu.memory_space<vmem>>, vector<1x16x16xbf16>
    %11 = vector.shape_cast %10 : vector<1x16x16xbf16> to vector<16x16xbf16>
    %12 = arith.extf %11 : vector<16x16xbf16> to vector<16x16xf32>
    %13 = vector.shape_cast %0 : vector<16x32xf32> to vector<1x16x32xf32>
    %14 = vector.shape_cast %12 : vector<16x16xf32> to vector<16x16x1xf32>
    %15 = vector.broadcast %13 : vector<1x16x32xf32> to vector<16x16x32xf32>
    %16 = vector.broadcast %14 : vector<16x16x1xf32> to vector<16x16x32xf32>
    %17 = arith.addf %15, %16 : vector<16x16x32xf32>
    %cst_6 = arith.constant dense<0xFF800000> : vector<16x32xf32>
    %18 = vector.multi_reduction <maximumf>, %17, %cst_6 [1] : vector<16x16x32xf32> to vector<16x32xf32>
    %c2 = arith.constant 2 : index
    %c0_7 = arith.constant 0 : index
    %c0_8 = arith.constant 0 : index
    %19 = vector.load %arg4[%c2, %c0_7, %c0_8] : memref<3x16x16xbf16, #tpu.memory_space<vmem>>, vector<1x16x16xbf16>
    %20 = vector.shape_cast %19 : vector<1x16x16xbf16> to vector<16x16xbf16>
    %21 = arith.extf %20 : vector<16x16xbf16> to vector<16x16xf32>
    %22 = vector.shape_cast %0 : vector<16x32xf32> to vector<1x16x32xf32>
    %23 = vector.shape_cast %21 : vector<16x16xf32> to vector<16x16x1xf32>
    %24 = vector.broadcast %22 : vector<1x16x32xf32> to vector<16x16x32xf32>
    %25 = vector.broadcast %23 : vector<16x16x1xf32> to vector<16x16x32xf32>
    %26 = arith.addf %24, %25 : vector<16x16x32xf32>
    %cst_9 = arith.constant dense<0xFF800000> : vector<16x32xf32>
    %27 = vector.multi_reduction <maximumf>, %26, %cst_9 [1] : vector<16x16x32xf32> to vector<16x32xf32>
    %c0_i32 = arith.constant 0 : i32
    %28 = arith.cmpi eq, %arg1, %c0_i32 : i32
    %29 = arith.extui %28 : i1 to i32
    %c0_i32_10 = arith.constant 0 : i32
    %30 = arith.cmpi ne, %29, %c0_i32_10 : i32
    scf.if %30 {
      %c0_15 = arith.constant 0 : index
      %c0_16 = arith.constant 0 : index
      %c0_17 = arith.constant 0 : index
      %37 = vector.load %arg6[%c0_15, %c0_16, %c0_17] : memref<3x16x32xf32, #tpu.memory_space<vmem>>, vector<1x16x32xf32>
      %38 = vector.shape_cast %37 : vector<1x16x32xf32> to vector<16x32xf32>
      %39 = vector.shape_cast %9 : vector<16x32xf32> to vector<1x16x32xf32>
      tpu.vector_store %arg6[%c0_15, %c0_16, %c0_17], %39 {strides = array<i32>} : memref<3x16x32xf32, #tpu.memory_space<vmem>>, vector<1x16x32xf32>,
      %c1_18 = arith.constant 1 : index
      %c0_19 = arith.constant 0 : index
      %c0_20 = arith.constant 0 : index
      %40 = vector.load %arg6[%c1_18, %c0_19, %c0_20] : memref<3x16x32xf32, #tpu.memory_space<vmem>>, vector<1x16x32xf32>
      %41 = vector.shape_cast %40 : vector<1x16x32xf32> to vector<16x32xf32>
      %42 = vector.shape_cast %18 : vector<16x32xf32> to vector<1x16x32xf32>
      tpu.vector_store %arg6[%c1_18, %c0_19, %c0_20], %42 {strides = array<i32>} : memref<3x16x32xf32, #tpu.memory_space<vmem>>, vector<1x16x32xf32>,
      %c2_21 = arith.constant 2 : index
      %c0_22 = arith.constant 0 : index
      %c0_23 = arith.constant 0 : index
      %43 = vector.load %arg6[%c2_21, %c0_22, %c0_23] : memref<3x16x32xf32, #tpu.memory_space<vmem>>, vector<1x16x32xf32>
      %44 = vector.shape_cast %43 : vector<1x16x32xf32> to vector<16x32xf32>
      %45 = vector.shape_cast %27 : vector<16x32xf32> to vector<1x16x32xf32>
      tpu.vector_store %arg6[%c2_21, %c0_22, %c0_23], %45 {strides = array<i32>} : memref<3x16x32xf32, #tpu.memory_space<vmem>>, vector<1x16x32xf32>,
    } else {
    }
    %c0_i32_11 = arith.constant 0 : i32
    %31 = arith.cmpi sgt, %arg1, %c0_i32_11 : i32
    %32 = arith.extui %31 : i1 to i32
    %c0_i32_12 = arith.constant 0 : i32
    %33 = arith.cmpi ne, %32, %c0_i32_12 : i32
    scf.if %33 {
      %c0_15 = arith.constant 0 : index
      %c0_16 = arith.constant 0 : index
      %c0_17 = arith.constant 0 : index
      %37 = vector.load %arg6[%c0_15, %c0_16, %c0_17] : memref<3x16x32xf32, #tpu.memory_space<vmem>>, vector<1x16x32xf32>
      %38 = vector.shape_cast %37 : vector<1x16x32xf32> to vector<16x32xf32>
      %39 = arith.maximumf %38, %9 : vector<16x32xf32>
      %c0_18 = arith.constant 0 : index
      %c0_19 = arith.constant 0 : index
      %c0_20 = arith.constant 0 : index
      %40 = vector.load %arg6[%c0_18, %c0_19, %c0_20] : memref<3x16x32xf32, #tpu.memory_space<vmem>>, vector<1x16x32xf32>
      %41 = vector.shape_cast %40 : vector<1x16x32xf32> to vector<16x32xf32>
      %42 = vector.shape_cast %39 : vector<16x32xf32> to vector<1x16x32xf32>
      tpu.vector_store %arg6[%c0_18, %c0_19, %c0_20], %42 {strides = array<i32>} : memref<3x16x32xf32, #tpu.memory_space<vmem>>, vector<1x16x32xf32>,
      %c1_21 = arith.constant 1 : index
      %c0_22 = arith.constant 0 : index
      %c0_23 = arith.constant 0 : index
      %43 = vector.load %arg6[%c1_21, %c0_22, %c0_23] : memref<3x16x32xf32, #tpu.memory_space<vmem>>, vector<1x16x32xf32>
      %44 = vector.shape_cast %43 : vector<1x16x32xf32> to vector<16x32xf32>
      %45 = arith.maximumf %44, %18 : vector<16x32xf32>
      %c1_24 = arith.constant 1 : index
      %c0_25 = arith.constant 0 : index
      %c0_26 = arith.constant 0 : index
      %46 = vector.load %arg6[%c1_24, %c0_25, %c0_26] : memref<3x16x32xf32, #tpu.memory_space<vmem>>, vector<1x16x32xf32>
      %47 = vector.shape_cast %46 : vector<1x16x32xf32> to vector<16x32xf32>
      %48 = vector.shape_cast %45 : vector<16x32xf32> to vector<1x16x32xf32>
      tpu.vector_store %arg6[%c1_24, %c0_25, %c0_26], %48 {strides = array<i32>} : memref<3x16x32xf32, #tpu.memory_space<vmem>>, vector<1x16x32xf32>,
      %c2_27 = arith.constant 2 : index
      %c0_28 = arith.constant 0 : index
      %c0_29 = arith.constant 0 : index
      %49 = vector.load %arg6[%c2_27, %c0_28, %c0_29] : memref<3x16x32xf32, #tpu.memory_space<vmem>>, vector<1x16x32xf32>
      %50 = vector.shape_cast %49 : vector<1x16x32xf32> to vector<16x32xf32>
      %51 = arith.maximumf %50, %27 : vector<16x32xf32>
      %c2_30 = arith.constant 2 : index
      %c0_31 = arith.constant 0 : index
      %c0_32 = arith.constant 0 : index
      %52 = vector.load %arg6[%c2_30, %c0_31, %c0_32] : memref<3x16x32xf32, #tpu.memory_space<vmem>>, vector<1x16x32xf32>
      %53 = vector.shape_cast %52 : vector<1x16x32xf32> to vector<16x32xf32>
      %54 = vector.shape_cast %51 : vector<16x32xf32> to vector<1x16x32xf32>
      tpu.vector_store %arg6[%c2_30, %c0_31, %c0_32], %54 {strides = array<i32>} : memref<3x16x32xf32, #tpu.memory_space<vmem>>, vector<1x16x32xf32>,
    } else {
    }
    %c0_i32_13 = arith.constant 0 : i32
    %34 = arith.cmpi eq, %arg1, %c0_i32_13 : i32
    %35 = arith.extui %34 : i1 to i32
    %c0_i32_14 = arith.constant 0 : i32
    %36 = arith.cmpi ne, %35, %c0_i32_14 : i32
    scf.if %36 {
      %c0_15 = arith.constant 0 : index
      %c0_16 = arith.constant 0 : index
      %37 = vector.load %arg2[%c0_15, %c0_16] : memref<16x32xf32, #tpu.memory_space<vmem>>, vector<16x32xf32>
      %c0_17 = arith.constant 0 : index
      %c0_18 = arith.constant 0 : index
      %c0_19 = arith.constant 0 : index
      %38 = vector.load %arg6[%c0_17, %c0_18, %c0_19] : memref<3x16x32xf32, #tpu.memory_space<vmem>>, vector<1x16x32xf32>
      %39 = vector.shape_cast %38 : vector<1x16x32xf32> to vector<16x32xf32>
      %cst_20 = arith.constant 0xFF800000 : f32
      %40 = vector.broadcast %cst_20 : f32 to vector<16x32xf32>
      %41 = arith.cmpf oeq, %39, %40 : vector<16x32xf32>
      %cst_21 = arith.constant 0.000000e+00 : f32
      %42 = vector.broadcast %cst_21 : f32 to vector<16x32xf32>
      %43 = arith.select %41, %42, %39 : vector<16x32xi1>, vector<16x32xf32>
      %c1_22 = arith.constant 1 : index
      %c0_23 = arith.constant 0 : index
      %c0_24 = arith.constant 0 : index
      %44 = vector.load %arg6[%c1_22, %c0_23, %c0_24] : memref<3x16x32xf32, #tpu.memory_space<vmem>>, vector<1x16x32xf32>
      %45 = vector.shape_cast %44 : vector<1x16x32xf32> to vector<16x32xf32>
      %cst_25 = arith.constant 0xFF800000 : f32
      %46 = vector.broadcast %cst_25 : f32 to vector<16x32xf32>
      %47 = arith.cmpf oeq, %45, %46 : vector<16x32xf32>
      %cst_26 = arith.constant 0.000000e+00 : f32
      %48 = vector.broadcast %cst_26 : f32 to vector<16x32xf32>
      %49 = arith.select %47, %48, %45 : vector<16x32xi1>, vector<16x32xf32>
      %c2_27 = arith.constant 2 : index
      %c0_28 = arith.constant 0 : index
      %c0_29 = arith.constant 0 : index
      %50 = vector.load %arg6[%c2_27, %c0_28, %c0_29] : memref<3x16x32xf32, #tpu.memory_space<vmem>>, vector<1x16x32xf32>
      %51 = vector.shape_cast %50 : vector<1x16x32xf32> to vector<16x32xf32>
      %cst_30 = arith.constant 0xFF800000 : f32
      %52 = vector.broadcast %cst_30 : f32 to vector<16x32xf32>
      %53 = arith.cmpf oeq, %51, %52 : vector<16x32xf32>
      %cst_31 = arith.constant 0.000000e+00 : f32
      %54 = vector.broadcast %cst_31 : f32 to vector<16x32xf32>
      %55 = arith.select %53, %54, %51 : vector<16x32xi1>, vector<16x32xf32>
      %56 = tpu.concatenate %37, %43, %49, %55 in 1 : vector<16x32xf32>, vector<16x32xf32>, vector<16x32xf32>, vector<16x32xf32> -> vector<16x128xf32>
      %c0_32 = arith.constant 0 : index
      %c0_33 = arith.constant 0 : index
      %57 = vector.load %arg5[%c0_32, %c0_33] : memref<16x128xf32, #tpu.memory_space<vmem>>, vector<16x128xf32>
      tpu.vector_store %arg5[%c0_32, %c0_33], %56 {strides = array<i32>} : memref<16x128xf32, #tpu.memory_space<vmem>>, vector<16x128xf32>,
    } else {
    }
    return
  }
  func.func @transform_0(%arg0: i32, %arg1: i32) -> (i32, i32) {
    %c0_i32 = arith.constant 0 : i32
    %c0_i32_0 = arith.constant 0 : i32
    return %arg0, %c0_i32 : i32, i32
  }
  func.func @transform_1(%arg0: i32, %arg1: i32) -> (i32, i32) {
    %c0_i32 = arith.constant 0 : i32
    %c0_i32_0 = arith.constant 0 : i32
    return %arg1, %c0_i32 : i32, i32
  }
  func.func @transform_2(%arg0: i32, %arg1: i32) -> (i32, i32, i32) {
    %c0_i32 = arith.constant 0 : i32
    %c0_i32_0 = arith.constant 0 : i32
    return %c0_i32, %arg0, %arg1 : i32, i32, i32
  }
  func.func @transform_3(%arg0: i32, %arg1: i32) -> (i32, i32) {
    %c0_i32 = arith.constant 0 : i32
    %c0_i32_0 = arith.constant 0 : i32
    return %arg0, %c0_i32 : i32, i32
  }
}

</mosaic_0001>

<llo_original>
// kernel: tpu_custom_call.1
$region0: #{tpu_custom_call.1}
  #allocation0 [shape = 'u32[]', space=smem, size = 0x4, offset = 0x4, fixed_abs, tag = 'smem constant byte address 0x4 - core index']
  #allocation1 [shape = 'u32[144,128]{1,0:T(1,128)}', space=vmem, size = 0x12000, scoped, tag = 'internal scratch']
  #allocation2 [shape = 'f32[3,16,32]{2,1,0:T(8,128)}', space=vmem, size = 0x6000, scoped, tag = 'scratch operand']
  %s0 = inlined_call_operand.hbm [shape: f32[16,32], index: 0, kind: input, shape index: {}]
  %s1 = inlined_call_operand.hbm [shape: f32[16,32], index: 1, kind: input, shape index: {}]
  %s2 = inlined_call_operand.hbm [shape: bf16[3,16,16], index: 2, kind: input, shape index: {}]
  %s3 = inlined_call_operand.hbm [shape: f32[16,128], index: 3, kind: output, shape index: {}]
  %s4 = sld [smem:[#allocation0]]
  $region46: #{tpu_custom_call.1} parent=0
    _
  %s6 = ssub.s32 1, %s4
  %s7 = scalar_select 0, %s6, %s4
  $region1: #{tpu_custom_call.1} parent=0
    #allocation3 [shape = 'u8[8192]{0}', space=vmem, size = 0x2000, scoped, tag = 'input window, operand 0, single buffered']
    #allocation4 [shape = 's32[1]{0}', space=sflag, size = 0x4, scoped, tag = 'scoped memory for tpu_custom_call.1']
    #allocation5 [shape = 's32[1]{0}', space=sflag, size = 0x4, scoped, tag = 'scoped memory for tpu_custom_call.1']
    #allocation6 [shape = 'u8[8192]{0}', space=vmem, size = 0x2000, scoped, tag = 'input window, operand 1, single buffered']
    #allocation7 [shape = 's32[1]{0}', space=sflag, size = 0x4, scoped, tag = 'scoped memory for tpu_custom_call.1']
    #allocation8 [shape = 'u8[12288]{0}', space=vmem, size = 0x3000, scoped, tag = 'input window, operand 2, single buffered']
    #allocation9 [shape = 'u8[8192]{0}', space=vmem, size = 0x2000, scoped, tag = 'output window, operand 0, single buffered']
    %8 = vsyncpa [#allocation4], 0
    %9 = vsyncpa [#allocation7], 0
    %10 = vsyncpa [#allocation5], 0
    // Predicated region
    $region2: #{tpu_custom_call.1} parent=1 // pred_check
      _
    $region3: #{tpu_custom_call.1} parent=1 // pred_check_branch
      %12 = sbr.rel (0) target = $region5
    $region4: #{tpu_custom_call.1} parent=1 // pred_region
      %s14 = ssub.s32 256, 256
      %15 = vsyncadd [#allocation4], %s14
      %s16 = sshll.u32 [#allocation3], 4
      %s17 = int_to_ptr.vmem [resolvable:$true] %s16
      %22 = dma.hbm_to_vmem [thread:$0]  %s0, 256, %s17, [#allocation4], 128, 128, 8
    $region5: #{tpu_custom_call.1} parent=1 // pred_fallthru
      _
    // Predicated region
    $region6: #{tpu_custom_call.1} parent=1 // pred_check
      _
    $region7: #{tpu_custom_call.1} parent=1 // pred_check_branch
      %24 = sbr.rel (0) target = $region9
    $region8: #{tpu_custom_call.1} parent=1 // pred_region
      %s26 = ssub.s32 256, 256
      %27 = vsyncadd [#allocation7], %s26
      %s28 = sshll.u32 [#allocation6], 4
      %s29 = int_to_ptr.vmem [resolvable:$true] %s28
      %34 = dma.hbm_to_vmem [thread:$0]  %s1, 256, %s29, [#allocation7], 128, 128, 8
    $region9: #{tpu_custom_call.1} parent=1 // pred_fallthru
      _
    // Predicated region
    $region10: #{tpu_custom_call.1} parent=1 // pred_check
      _
    $region11: #{tpu_custom_call.1} parent=1 // pred_check_branch
      %36 = sbr.rel (0) target = $region13
    $region12: #{tpu_custom_call.1} parent=1 // pred_region
      %s38 = ssub.s32 384, 384
      %39 = vsyncadd [#allocation7], %s38
      %s40 = sshll.u32 [#allocation8], 4
      %s41 = int_to_ptr.vmem [resolvable:$true] %s40
      %46 = dma.hbm_to_vmem [thread:$0]  %s2, 384, %s41, [#allocation7], 64, 64, 4
    $region13: #{tpu_custom_call.1} parent=1 // pred_fallthru
      _
    // Predicated region
    $region14: #{tpu_custom_call.1} parent=1 // pred_check
      _
    $region15: #{tpu_custom_call.1} parent=1 // pred_check_branch
      %48 = sbr.rel (0) target = $region17
    $region16: #{tpu_custom_call.1} parent=1 // pred_region
      %49 = dma.done [#allocation4], 256
    $region17: #{tpu_custom_call.1} parent=1 // pred_fallthru
      _
    // Predicated region
    $region18: #{tpu_custom_call.1} parent=1 // pred_check
      _
    $region19: #{tpu_custom_call.1} parent=1 // pred_check_branch
      %51 = sbr.rel (0) target = $region21
    $region20: #{tpu_custom_call.1} parent=1 // pred_region
      %52 = dma.done [#allocation7], 256
    $region21: #{tpu_custom_call.1} parent=1 // pred_fallthru
      _
    // Predicated region
    $region22: #{tpu_custom_call.1} parent=1 // pred_check
      _
    $region23: #{tpu_custom_call.1} parent=1 // pred_check_branch
      %54 = sbr.rel (0) target = $region25
    $region24: #{tpu_custom_call.1} parent=1 // pred_region
      %55 = dma.done [#allocation7], 384
    $region25: #{tpu_custom_call.1} parent=1 // pred_fallthru
      _
    %v56 = vld [vmem:[#allocation6] sm:$0xff]
    %v57 = vld [vmem:[#allocation6 + $0x8] sm:$0xff]
    %v58 = vld [vmem:[#allocation8] sm:$0xf]
    %v59 = vld [vmem:[#allocation8 + $0x4] sm:$0xf]
    %v60 = vunpack.c.l.bf16 %v58
    %v61 = vunpack.c.l.bf16 %v59
    %v62 = vlaneseq
    %v63 = vshrl.u32 %v62, 7
    %v64 = vsub.s32 0, %v63
    %v65 = vrot.slane %v60, %v64
    %67 = vbcast.lane.b32.xlu0 %v65, 256
    %v68 = vpop.permute.xlu0 %67
    %s70 = sor.u32 256, 8
    %71 = vbcast.lane.b32.xlu0 %v65, %s70
    %v72 = vpop.permute.xlu0 %71
    %v73 = vlaneseq
    %v74 = vshrl.u32 %v73, 7
    %v75 = vsub.s32 1, %v74
    %v76 = vrot.slane %v60, %v75
    %78 = vbcast.lane.b32.xlu0 %v76, 256
    %v79 = vpop.permute.xlu0 %78
    %s81 = sor.u32 256, 8
    %82 = vbcast.lane.b32.xlu0 %v76, %s81
    %v83 = vpop.permute.xlu0 %82
    %v84 = vlaneseq
    %v85 = vshrl.u32 %v84, 7
    %v86 = vsub.s32 2, %v85
    %v87 = vrot.slane %v60, %v86
    %89 = vbcast.lane.b32.xlu0 %v87, 256
    %v90 = vpop.permute.xlu0 %89
    %s92 = sor.u32 256, 8
    %93 = vbcast.lane.b32.xlu0 %v87, %s92
    %v94 = vpop.permute.xlu0 %93
    %v95 = vlaneseq
    %v96 = vshrl.u32 %v95, 7
    %v97 = vsub.s32 3, %v96
    %v98 = vrot.slane %v60, %v97
    %100 = vbcast.lane.b32.xlu0 %v98, 256
    %v101 = vpop.permute.xlu0 %100
    %s103 = sor.u32 256, 8
    %104 = vbcast.lane.b32.xlu0 %v98, %s103
    %v105 = vpop.permute.xlu0 %104
    %v106 = vlaneseq
    %v107 = vshrl.u32 %v106, 7
    %v108 = vsub.s32 4, %v107
    %v109 = vrot.slane %v60, %v108
    %111 = vbcast.lane.b32.xlu0 %v109, 256
    %v112 = vpop.permute.xlu0 %111
    %s114 = sor.u32 256, 8
    %115 = vbcast.lane.b32.xlu0 %v109, %s114
    %v116 = vpop.permute.xlu0 %115
    %v117 = vlaneseq
    %v118 = vshrl.u32 %v117, 7
    %v119 = vsub.s32 5, %v118
    %v120 = vrot.slane %v60, %v119
    %122 = vbcast.lane.b32.xlu0 %v120, 256
    %v123 = vpop.permute.xlu0 %122
    %s125 = sor.u32 256, 8
    %126 = vbcast.lane.b32.xlu0 %v120, %s125
    %v127 = vpop.permute.xlu0 %126
    %v128 = vlaneseq
    %v129 = vshrl.u32 %v128, 7
    %v130 = vsub.s32 6, %v129
    %v131 = vrot.slane %v60, %v130
    %133 = vbcast.lane.b32.xlu0 %v131, 256
    %v134 = vpop.permute.xlu0 %133
    %s136 = sor.u32 256, 8
    %137 = vbcast.lane.b32.xlu0 %v131, %s136
    %v138 = vpop.permute.xlu0 %137
    %v139 = vlaneseq
    %v140 = vshrl.u32 %v139, 7
    %v141 = vsub.s32 7, %v140
    %v142 = vrot.slane %v60, %v141
    %144 = vbcast.lane.b32.xlu0 %v142, 256
    %v145 = vpop.permute.xlu0 %144
    %s147 = sor.u32 256, 8
    %148 = vbcast.lane.b32.xlu0 %v142, %s147
    %v149 = vpop.permute.xlu0 %148
    %v150 = vlaneseq
    %v151 = vshrl.u32 %v150, 7
    %v152 = vsub.s32 0, %v151
    %v153 = vrot.slane %v61, %v152
    %155 = vbcast.lane.b32.xlu0 %v153, 256
    %v156 = vpop.permute.xlu0 %155
    %s158 = sor.u32 256, 8
    %159 = vbcast.lane.b32.xlu0 %v153, %s158
    %v160 = vpop.permute.xlu0 %159
    %v161 = vlaneseq
    %v162 = vshrl.u32 %v161, 7
    %v163 = vsub.s32 1, %v162
    %v164 = vrot.slane %v61, %v163
    %166 = vbcast.lane.b32.xlu0 %v164, 256
    %v167 = vpop.permute.xlu0 %166
    %s169 = sor.u32 256, 8
    %170 = vbcast.lane.b32.xlu0 %v164, %s169
    %v171 = vpop.permute.xlu0 %170
    %v172 = vlaneseq
    %v173 = vshrl.u32 %v172, 7
    %v174 = vsub.s32 2, %v173
    %v175 = vrot.slane %v61, %v174
    %177 = vbcast.lane.b32.xlu0 %v175, 256
    %v178 = vpop.permute.xlu0 %177
    %s180 = sor.u32 256, 8
    %181 = vbcast.lane.b32.xlu0 %v175, %s180
    %v182 = vpop.permute.xlu0 %181
    %v183 = vlaneseq
    %v184 = vshrl.u32 %v183, 7
    %v185 = vsub.s32 3, %v184
    %v186 = vrot.slane %v61, %v185
    %188 = vbcast.lane.b32.xlu0 %v186, 256
    %v189 = vpop.permute.xlu0 %188
    %s191 = sor.u32 256, 8
    %192 = vbcast.lane.b32.xlu0 %v186, %s191
    %v193 = vpop.permute.xlu0 %192
    %v194 = vlaneseq
    %v195 = vshrl.u32 %v194, 7
    %v196 = vsub.s32 4, %v195
    %v197 = vrot.slane %v61, %v196
    %199 = vbcast.lane.b32.xlu0 %v197, 256
    %v200 = vpop.permute.xlu0 %199
    %s202 = sor.u32 256, 8
    %203 = vbcast.lane.b32.xlu0 %v197, %s202
    %v204 = vpop.permute.xlu0 %203
    %v205 = vlaneseq
    %v206 = vshrl.u32 %v205, 7
    %v207 = vsub.s32 5, %v206
    %v208 = vrot.slane %v61, %v207
    %210 = vbcast.lane.b32.xlu0 %v208, 256
    %v211 = vpop.permute.xlu0 %210
    %s213 = sor.u32 256, 8
    %214 = vbcast.lane.b32.xlu0 %v208, %s213
    %v215 = vpop.permute.xlu0 %214
    %v216 = vlaneseq
    %v217 = vshrl.u32 %v216, 7
    %v218 = vsub.s32 6, %v217
    %v219 = vrot.slane %v61, %v218
    %221 = vbcast.lane.b32.xlu0 %v219, 256
    %v222 = vpop.permute.xlu0 %221
    %s224 = sor.u32 256, 8
    %225 = vbcast.lane.b32.xlu0 %v219, %s224
    %v226 = vpop.permute.xlu0 %225
    %v227 = vlaneseq
    %v228 = vshrl.u32 %v227, 7
    %v229 = vsub.s32 7, %v228
    %v230 = vrot.slane %v61, %v229
    %232 = vbcast.lane.b32.xlu0 %v230, 256
    %v233 = vpop.permute.xlu0 %232
    %s235 = sor.u32 256, 8
    %236 = vbcast.lane.b32.xlu0 %v230, %s235
    %v237 = vpop.permute.xlu0 %236
    %v238 = vadd.f32 %v56, %v68
    %v239 = vadd.f32 %v57, %v72
    %v240 = vadd.f32 %v56, %v79
    %v241 = vadd.f32 %v57, %v83
    %v242 = vadd.f32 %v56, %v90
    %v243 = vadd.f32 %v57, %v94
    %v244 = vadd.f32 %v56, %v101
    %v245 = vadd.f32 %v57, %v105
    %v246 = vadd.f32 %v56, %v112
    %v247 = vadd.f32 %v57, %v116
    %v248 = vadd.f32 %v56, %v123
    %v249 = vadd.f32 %v57, %v127
    %v250 = vadd.f32 %v56, %v134
    %v251 = vadd.f32 %v57, %v138
    %v252 = vadd.f32 %v56, %v145
    %v253 = vadd.f32 %v57, %v149
    %v254 = vadd.f32 %v56, %v156
    %v255 = vadd.f32 %v57, %v160
    %v256 = vadd.f32 %v56, %v167
    %v257 = vadd.f32 %v57, %v171
    %v258 = vadd.f32 %v56, %v178
    %v259 = vadd.f32 %v57, %v182
    %v260 = vadd.f32 %v56, %v189
    %v261 = vadd.f32 %v57, %v193
    %v262 = vadd.f32 %v56, %v200
    %v263 = vadd.f32 %v57, %v204
    %v264 = vadd.f32 %v56, %v211
    %v265 = vadd.f32 %v57, %v215
    %v266 = vadd.f32 %v56, %v222
    %v267 = vadd.f32 %v57, %v226
    %v268 = vadd.f32 %v56, %v233
    %v269 = vadd.f32 %v57, %v237
    %vm270 = vcmask 261120
    %v271 = vsel %vm270, %v238, -inf
    %v272 = vsel %vm270, %v239, -inf
    %v273 = vmax.f32 %v271, %v272
    %v274 = vrot.slane %v273, 4
    %v275 = vmax.f32 %v273, %v274
    %v276 = vrot.slane %v275, 2
    %v277 = vmax.f32 %v275, %v276
    %v278 = vrot.slane %v277, 1
    %v279 = vmax.f32 %v277, %v278
    %v280 = vsel %vm270, %v240, -inf
    %v281 = vsel %vm270, %v241, -inf
    %v282 = vmax.f32 %v280, %v281
    %v283 = vrot.slane %v282, 4
    %v284 = vmax.f32 %v282, %v283
    %v285 = vrot.slane %v284, 2
    %v286 = vmax.f32 %v284, %v285
    %v287 = vrot.slane %v286, 1
    %v288 = vmax.f32 %v286, %v287
    %v289 = vsel %vm270, %v242, -inf
    %v290 = vsel %vm270, %v243, -inf
    %v291 = vmax.f32 %v289, %v290
    %v292 = vrot.slane %v291, 4
    %v293 = vmax.f32 %v291, %v292
    %v294 = vrot.slane %v293, 2
    %v295 = vmax.f32 %v293, %v294
    %v296 = vrot.slane %v295, 1
    %v297 = vmax.f32 %v295, %v296
    %v298 = vsel %vm270, %v244, -inf
    %v299 = vsel %vm270, %v245, -inf
    %v300 = vmax.f32 %v298, %v299
    %v301 = vrot.slane %v300, 4
    %v302 = vmax.f32 %v300, %v301
    %v303 = vrot.slane %v302, 2
    %v304 = vmax.f32 %v302, %v303
    %v305 = vrot.slane %v304, 1
    %v306 = vmax.f32 %v304, %v305
    %v307 = vsel %vm270, %v246, -inf
    %v308 = vsel %vm270, %v247, -inf
    %v309 = vmax.f32 %v307, %v308
    %v310 = vrot.slane %v309, 4
    %v311 = vmax.f32 %v309, %v310
    %v312 = vrot.slane %v311, 2
    %v313 = vmax.f32 %v311, %v312
    %v314 = vrot.slane %v313, 1
    %v315 = vmax.f32 %v313, %v314
    %v316 = vsel %vm270, %v248, -inf
    %v317 = vsel %vm270, %v249, -inf
    %v318 = vmax.f32 %v316, %v317
    %v319 = vrot.slane %v318, 4
    %v320 = vmax.f32 %v318, %v319
    %v321 = vrot.slane %v320, 2
    %v322 = vmax.f32 %v320, %v321
    %v323 = vrot.slane %v322, 1
    %v324 = vmax.f32 %v322, %v323
    %v325 = vsel %vm270, %v250, -inf
    %v326 = vsel %vm270, %v251, -inf
    %v327 = vmax.f32 %v325, %v326
    %v328 = vrot.slane %v327, 4
    %v329 = vmax.f32 %v327, %v328
    %v330 = vrot.slane %v329, 2
    %v331 = vmax.f32 %v329, %v330
    %v332 = vrot.slane %v331, 1
    %v333 = vmax.f32 %v331, %v332
    %v334 = vsel %vm270, %v252, -inf
    %v335 = vsel %vm270, %v253, -inf
    %v336 = vmax.f32 %v334, %v335
    %v337 = vrot.slane %v336, 4
    %v338 = vmax.f32 %v336, %v337
    %v339 = vrot.slane %v338, 2
    %v340 = vmax.f32 %v338, %v339
    %v341 = vrot.slane %v340, 1
    %v342 = vmax.f32 %v340, %v341
    %v343 = vsel %vm270, %v254, -inf
    %v344 = vsel %vm270, %v255, -inf
    %v345 = vmax.f32 %v343, %v344
    %v346 = vrot.slane %v345, 4
    %v347 = vmax.f32 %v345, %v346
    %v348 = vrot.slane %v347, 2
    %v349 = vmax.f32 %v347, %v348
    %v350 = vrot.slane %v349, 1
    %v351 = vmax.f32 %v349, %v350
    %v352 = vsel %vm270, %v256, -inf
    %v353 = vsel %vm270, %v257, -inf
    %v354 = vmax.f32 %v352, %v353
    %v355 = vrot.slane %v354, 4
    %v356 = vmax.f32 %v354, %v355
    %v357 = vrot.slane %v356, 2
    %v358 = vmax.f32 %v356, %v357
    %v359 = vrot.slane %v358, 1
    %v360 = vmax.f32 %v358, %v359
    %v361 = vsel %vm270, %v258, -inf
    %v362 = vsel %vm270, %v259, -inf
    %v363 = vmax.f32 %v361, %v362
    %v364 = vrot.slane %v363, 4
    %v365 = vmax.f32 %v363, %v364
    %v366 = vrot.slane %v365, 2
    %v367 = vmax.f32 %v365, %v366
    %v368 = vrot.slane %v367, 1
    %v369 = vmax.f32 %v367, %v368
    %v370 = vsel %vm270, %v260, -inf
    %v371 = vsel %vm270, %v261, -inf
    %v372 = vmax.f32 %v370, %v371
    %v373 = vrot.slane %v372, 4
    %v374 = vmax.f32 %v372, %v373
    %v375 = vrot.slane %v374, 2
    %v376 = vmax.f32 %v374, %v375
    %v377 = vrot.slane %v376, 1
    %v378 = vmax.f32 %v376, %v377
    %v379 = vsel %vm270, %v262, -inf
    %v380 = vsel %vm270, %v263, -inf
    %v381 = vmax.f32 %v379, %v380
    %v382 = vrot.slane %v381, 4
    %v383 = vmax.f32 %v381, %v382
    %v384 = vrot.slane %v383, 2
    %v385 = vmax.f32 %v383, %v384
    %v386 = vrot.slane %v385, 1
    %v387 = vmax.f32 %v385, %v386
    %v388 = vsel %vm270, %v264, -inf
    %v389 = vsel %vm270, %v265, -inf
    %v390 = vmax.f32 %v388, %v389
    %v391 = vrot.slane %v390, 4
    %v392 = vmax.f32 %v390, %v391
    %v393 = vrot.slane %v392, 2
    %v394 = vmax.f32 %v392, %v393
    %v395 = vrot.slane %v394, 1
    %v396 = vmax.f32 %v394, %v395
    %v397 = vsel %vm270, %v266, -inf
    %v398 = vsel %vm270, %v267, -inf
    %v399 = vmax.f32 %v397, %v398
    %v400 = vrot.slane %v399, 4
    %v401 = vmax.f32 %v399, %v400
    %v402 = vrot.slane %v401, 2
    %v403 = vmax.f32 %v401, %v402
    %v404 = vrot.slane %v403, 1
    %v405 = vmax.f32 %v403, %v404
    %v406 = vsel %vm270, %v268, -inf
    %v407 = vsel %vm270, %v269, -inf
    %v408 = vmax.f32 %v406, %v407
    %v409 = vrot.slane %v408, 4
    %v410 = vmax.f32 %v408, %v409
    %v411 = vrot.slane %v410, 2
    %v412 = vmax.f32 %v410, %v411
    %v413 = vrot.slane %v412, 1
    %v414 = vmax.f32 %v412, %v413
    %s415 = scalar_lea.vmem [#allocation8], 8
    %v416 = vld [vmem:[%s415] sm:$0xf]
    %v417 = vld [vmem:[%s415 + $0x4] sm:$0xf]
    %v418 = vunpack.c.l.bf16 %v416
    %v419 = vunpack.c.l.bf16 %v417
    %v420 = vlaneseq
    %v421 = vshrl.u32 %v420, 7
    %v422 = vsub.s32 0, %v421
    %v423 = vrot.slane %v418, %v422
    %425 = vbcast.lane.b32.xlu0 %v423, 256
    %v426 = vpop.permute.xlu0 %425
    %s428 = sor.u32 256, 8
    %429 = vbcast.lane.b32.xlu0 %v423, %s428
    %v430 = vpop.permute.xlu0 %429
    %v431 = vlaneseq
    %v432 = vshrl.u32 %v431, 7
    %v433 = vsub.s32 1, %v432
    %v434 = vrot.slane %v418, %v433
    %436 = vbcast.lane.b32.xlu0 %v434, 256
    %v437 = vpop.permute.xlu0 %436
    %s439 = sor.u32 256, 8
    %440 = vbcast.lane.b32.xlu0 %v434, %s439
    %v441 = vpop.permute.xlu0 %440
    %v442 = vlaneseq
    %v443 = vshrl.u32 %v442, 7
    %v444 = vsub.s32 2, %v443
    %v445 = vrot.slane %v418, %v444
    %447 = vbcast.lane.b32.xlu0 %v445, 256
    %v448 = vpop.permute.xlu0 %447
    %s450 = sor.u32 256, 8
    %451 = vbcast.lane.b32.xlu0 %v445, %s450
    %v452 = vpop.permute.xlu0 %451
    %v453 = vlaneseq
    %v454 = vshrl.u32 %v453, 7
    %v455 = vsub.s32 3, %v454
    %v456 = vrot.slane %v418, %v455
    %458 = vbcast.lane.b32.xlu0 %v456, 256
    %v459 = vpop.permute.xlu0 %458
    %s461 = sor.u32 256, 8
    %462 = vbcast.lane.b32.xlu0 %v456, %s461
    %v463 = vpop.permute.xlu0 %462
    %v464 = vlaneseq
    %v465 = vshrl.u32 %v464, 7
    %v466 = vsub.s32 4, %v465
    %v467 = vrot.slane %v418, %v466
    %469 = vbcast.lane.b32.xlu0 %v467, 256
    %v470 = vpop.permute.xlu0 %469
    %s472 = sor.u32 256, 8
    %473 = vbcast.lane.b32.xlu0 %v467, %s472
    %v474 = vpop.permute.xlu0 %473
    %v475 = vlaneseq
    %v476 = vshrl.u32 %v475, 7
    %v477 = vsub.s32 5, %v476
    %v478 = vrot.slane %v418, %v477
    %480 = vbcast.lane.b32.xlu0 %v478, 256
    %v481 = vpop.permute.xlu0 %480
    %s483 = sor.u32 256, 8
    %484 = vbcast.lane.b32.xlu0 %v478, %s483
    %v485 = vpop.permute.xlu0 %484
    %v486 = vlaneseq
    %v487 = vshrl.u32 %v486, 7
    %v488 = vsub.s32 6, %v487
    %v489 = vrot.slane %v418, %v488
    %491 = vbcast.lane.b32.xlu0 %v489, 256
    %v492 = vpop.permute.xlu0 %491
    %s494 = sor.u32 256, 8
    %495 = vbcast.lane.b32.xlu0 %v489, %s494
    %v496 = vpop.permute.xlu0 %495
    %v497 = vlaneseq
    %v498 = vshrl.u32 %v497, 7
    %v499 = vsub.s32 7, %v498
    %v500 = vrot.slane %v418, %v499
    %502 = vbcast.lane.b32.xlu0 %v500, 256
    %v503 = vpop.permute.xlu0 %502
    %s505 = sor.u32 256, 8
    %506 = vbcast.lane.b32.xlu0 %v500, %s505
    %v507 = vpop.permute.xlu0 %506
    %v508 = vlaneseq
    %v509 = vshrl.u32 %v508, 7
    %v510 = vsub.s32 0, %v509
    %v511 = vrot.slane %v419, %v510
    %513 = vbcast.lane.b32.xlu0 %v511, 256
    %v514 = vpop.permute.xlu0 %513
    %s516 = sor.u32 256, 8
    %517 = vbcast.lane.b32.xlu0 %v511, %s516
    %v518 = vpop.permute.xlu0 %517
    %v519 = vlaneseq
    %v520 = vshrl.u32 %v519, 7
    %v521 = vsub.s32 1, %v520
    %v522 = vrot.slane %v419, %v521
    %524 = vbcast.lane.b32.xlu0 %v522, 256
    %v525 = vpop.permute.xlu0 %524
    %s527 = sor.u32 256, 8
    %528 = vbcast.lane.b32.xlu0 %v522, %s527
    %v529 = vpop.permute.xlu0 %528
    %v530 = vlaneseq
    %v531 = vshrl.u32 %v530, 7
    %v532 = vsub.s32 2, %v531
    %v533 = vrot.slane %v419, %v532
    %535 = vbcast.lane.b32.xlu0 %v533, 256
    %v536 = vpop.permute.xlu0 %535
    %s538 = sor.u32 256, 8
    %539 = vbcast.lane.b32.xlu0 %v533, %s538
    %v540 = vpop.permute.xlu0 %539
    %v541 = vlaneseq
    %v542 = vshrl.u32 %v541, 7
    %v543 = vsub.s32 3, %v542
    %v544 = vrot.slane %v419, %v543
    %546 = vbcast.lane.b32.xlu0 %v544, 256
    %v547 = vpop.permute.xlu0 %546
    %s549 = sor.u32 256, 8
    %550 = vbcast.lane.b32.xlu0 %v544, %s549
    %v551 = vpop.permute.xlu0 %550
    %v552 = vlaneseq
    %v553 = vshrl.u32 %v552, 7
    %v554 = vsub.s32 4, %v553
    %v555 = vrot.slane %v419, %v554
    %557 = vbcast.lane.b32.xlu0 %v555, 256
    %v558 = vpop.permute.xlu0 %557
    %s560 = sor.u32 256, 8
    %561 = vbcast.lane.b32.xlu0 %v555, %s560
    %v562 = vpop.permute.xlu0 %561
    %v563 = vlaneseq
    %v564 = vshrl.u32 %v563, 7
    %v565 = vsub.s32 5, %v564
    %v566 = vrot.slane %v419, %v565
    %568 = vbcast.lane.b32.xlu0 %v566, 256
    %v569 = vpop.permute.xlu0 %568
    %s571 = sor.u32 256, 8
    %572 = vbcast.lane.b32.xlu0 %v566, %s571
    %v573 = vpop.permute.xlu0 %572
    %v574 = vlaneseq
    %v575 = vshrl.u32 %v574, 7
    %v576 = vsub.s32 6, %v575
    %v577 = vrot.slane %v419, %v576
    %579 = vbcast.lane.b32.xlu0 %v577, 256
    %v580 = vpop.permute.xlu0 %579
    %s582 = sor.u32 256, 8
    %583 = vbcast.lane.b32.xlu0 %v577, %s582
    %v584 = vpop.permute.xlu0 %583
    %v585 = vlaneseq
    %v586 = vshrl.u32 %v585, 7
    %v587 = vsub.s32 7, %v586
    %v588 = vrot.slane %v419, %v587
    %590 = vbcast.lane.b32.xlu0 %v588, 256
    %v591 = vpop.permute.xlu0 %590
    %s593 = sor.u32 256, 8
    %594 = vbcast.lane.b32.xlu0 %v588, %s593
    %v595 = vpop.permute.xlu0 %594
    %v596 = vadd.f32 %v56, %v426
    %v597 = vadd.f32 %v57, %v430
    %v598 = vadd.f32 %v56, %v437
    %v599 = vadd.f32 %v57, %v441
    %v600 = vadd.f32 %v56, %v448
    %v601 = vadd.f32 %v57, %v452
    %v602 = vadd.f32 %v56, %v459
    %v603 = vadd.f32 %v57, %v463
    %v604 = vadd.f32 %v56, %v470
    %v605 = vadd.f32 %v57, %v474
    %v606 = vadd.f32 %v56, %v481
    %v607 = vadd.f32 %v57, %v485
    %v608 = vadd.f32 %v56, %v492
    %v609 = vadd.f32 %v57, %v496
    %v610 = vadd.f32 %v56, %v503
    %v611 = vadd.f32 %v57, %v507
    %v612 = vadd.f32 %v56, %v514
    %v613 = vadd.f32 %v57, %v518
    %v614 = vadd.f32 %v56, %v525
    %v615 = vadd.f32 %v57, %v529
    %v616 = vadd.f32 %v56, %v536
    %v617 = vadd.f32 %v57, %v540
    %v618 = vadd.f32 %v56, %v547
    %v619 = vadd.f32 %v57, %v551
    %v620 = vadd.f32 %v56, %v558
    %v621 = vadd.f32 %v57, %v562
    %v622 = vadd.f32 %v56, %v569
    %v623 = vadd.f32 %v57, %v573
    %v624 = vadd.f32 %v56, %v580
    %v625 = vadd.f32 %v57, %v584
    %v626 = vadd.f32 %v56, %v591
    %v627 = vadd.f32 %v57, %v595
    %v628 = vsel %vm270, %v596, -inf
    %v629 = vsel %vm270, %v597, -inf
    %v630 = vmax.f32 %v628, %v629
    %v631 = vrot.slane %v630, 4
    %v632 = vmax.f32 %v630, %v631
    %v633 = vrot.slane %v632, 2
    %v634 = vmax.f32 %v632, %v633
    %v635 = vrot.slane %v634, 1
    %v636 = vmax.f32 %v634, %v635
    %v637 = vsel %vm270, %v598, -inf
    %v638 = vsel %vm270, %v599, -inf
    %v639 = vmax.f32 %v637, %v638
    %v640 = vrot.slane %v639, 4
    %v641 = vmax.f32 %v639, %v640
    %v642 = vrot.slane %v641, 2
    %v643 = vmax.f32 %v641, %v642
    %v644 = vrot.slane %v643, 1
    %v645 = vmax.f32 %v643, %v644
    %v646 = vsel %vm270, %v600, -inf
    %v647 = vsel %vm270, %v601, -inf
    %v648 = vmax.f32 %v646, %v647
    %v649 = vrot.slane %v648, 4
    %v650 = vmax.f32 %v648, %v649
    %v651 = vrot.slane %v650, 2
    %v652 = vmax.f32 %v650, %v651
    %v653 = vrot.slane %v652, 1
    %v654 = vmax.f32 %v652, %v653
    %v655 = vsel %vm270, %v602, -inf
    %v656 = vsel %vm270, %v603, -inf
    %v657 = vmax.f32 %v655, %v656
    %v658 = vrot.slane %v657, 4
    %v659 = vmax.f32 %v657, %v658
    %v660 = vrot.slane %v659, 2
    %v661 = vmax.f32 %v659, %v660
    %v662 = vrot.slane %v661, 1
    %v663 = vmax.f32 %v661, %v662
    %v664 = vsel %vm270, %v604, -inf
    %v665 = vsel %vm270, %v605, -inf
    %v666 = vmax.f32 %v664, %v665
    %v667 = vrot.slane %v666, 4
    %v668 = vmax.f32 %v666, %v667
    %v669 = vrot.slane %v668, 2
    %v670 = vmax.f32 %v668, %v669
    %v671 = vrot.slane %v670, 1
    %v672 = vmax.f32 %v670, %v671
    %v673 = vsel %vm270, %v606, -inf
    %v674 = vsel %vm270, %v607, -inf
    %v675 = vmax.f32 %v673, %v674
    %v676 = vrot.slane %v675, 4
    %v677 = vmax.f32 %v675, %v676
    %v678 = vrot.slane %v677, 2
    %v679 = vmax.f32 %v677, %v678
    %v680 = vrot.slane %v679, 1
    %v681 = vmax.f32 %v679, %v680
    %v682 = vsel %vm270, %v608, -inf
    %v683 = vsel %vm270, %v609, -inf
    %v684 = vmax.f32 %v682, %v683
    %v685 = vrot.slane %v684, 4
    %v686 = vmax.f32 %v684, %v685
    %v687 = vrot.slane %v686, 2
    %v688 = vmax.f32 %v686, %v687
    %v689 = vrot.slane %v688, 1
    %v690 = vmax.f32 %v688, %v689
    %v691 = vsel %vm270, %v610, -inf
    %v692 = vsel %vm270, %v611, -inf
    %v693 = vmax.f32 %v691, %v692
    %v694 = vrot.slane %v693, 4
    %v695 = vmax.f32 %v693, %v694
    %v696 = vrot.slane %v695, 2
    %v697 = vmax.f32 %v695, %v696
    %v698 = vrot.slane %v697, 1
    %v699 = vmax.f32 %v697, %v698
    %v700 = vsel %vm270, %v612, -inf
    %v701 = vsel %vm270, %v613, -inf
    %v702 = vmax.f32 %v700, %v701
    %v703 = vrot.slane %v702, 4
    %v704 = vmax.f32 %v702, %v703
    %v705 = vrot.slane %v704, 2
    %v706 = vmax.f32 %v704, %v705
    %v707 = vrot.slane %v706, 1
    %v708 = vmax.f32 %v706, %v707
    %v709 = vsel %vm270, %v614, -inf
    %v710 = vsel %vm270, %v615, -inf
    %v711 = vmax.f32 %v709, %v710
    %v712 = vrot.slane %v711, 4
    %v713 = vmax.f32 %v711, %v712
    %v714 = vrot.slane %v713, 2
    %v715 = vmax.f32 %v713, %v714
    %v716 = vrot.slane %v715, 1
    %v717 = vmax.f32 %v715, %v716
    %v718 = vsel %vm270, %v616, -inf
    %v719 = vsel %vm270, %v617, -inf
    %v720 = vmax.f32 %v718, %v719
    %v721 = vrot.slane %v720, 4
    %v722 = vmax.f32 %v720, %v721
    %v723 = vrot.slane %v722, 2
    %v724 = vmax.f32 %v722, %v723
    %v725 = vrot.slane %v724, 1
    %v726 = vmax.f32 %v724, %v725
    %v727 = vsel %vm270, %v618, -inf
    %v728 = vsel %vm270, %v619, -inf
    %v729 = vmax.f32 %v727, %v728
    %v730 = vrot.slane %v729, 4
    %v731 = vmax.f32 %v729, %v730
    %v732 = vrot.slane %v731, 2
    %v733 = vmax.f32 %v731, %v732
    %v734 = vrot.slane %v733, 1
    %v735 = vmax.f32 %v733, %v734
    %v736 = vsel %vm270, %v620, -inf
    %v737 = vsel %vm270, %v621, -inf
    %v738 = vmax.f32 %v736, %v737
    %v739 = vrot.slane %v738, 4
    %v740 = vmax.f32 %v738, %v739
    %v741 = vrot.slane %v740, 2
    %v742 = vmax.f32 %v740, %v741
    %v743 = vrot.slane %v742, 1
    %v744 = vmax.f32 %v742, %v743
    %v745 = vsel %vm270, %v622, -inf
    %v746 = vsel %vm270, %v623, -inf
    %v747 = vmax.f32 %v745, %v746
    %v748 = vrot.slane %v747, 4
    %v749 = vmax.f32 %v747, %v748
    %v750 = vrot.slane %v749, 2
    %v751 = vmax.f32 %v749, %v750
    %v752 = vrot.slane %v751, 1
    %v753 = vmax.f32 %v751, %v752
    %v754 = vsel %vm270, %v624, -inf
    %v755 = vsel %vm270, %v625, -inf
    %v756 = vmax.f32 %v754, %v755
    %v757 = vrot.slane %v756, 4
    %v758 = vmax.f32 %v756, %v757
    %v759 = vrot.slane %v758, 2
    %v760 = vmax.f32 %v758, %v759
    %v761 = vrot.slane %v760, 1
    %v762 = vmax.f32 %v760, %v761
    %v763 = vsel %vm270, %v626, -inf
    %v764 = vsel %vm270, %v627, -inf
    %v765 = vmax.f32 %v763, %v764
    %v766 = vrot.slane %v765, 4
    %v767 = vmax.f32 %v765, %v766
    %v768 = vrot.slane %v767, 2
    %v769 = vmax.f32 %v767, %v768
    %v770 = vrot.slane %v769, 1
    %v771 = vmax.f32 %v769, %v770
    %s772 = scalar_lea.vmem [#allocation8], 16
    %v773 = vld [vmem:[%s772] sm:$0xf]
    %v774 = vld [vmem:[%s772 + $0x4] sm:$0xf]
    %v775 = vunpack.c.l.bf16 %v773
    %v776 = vunpack.c.l.bf16 %v774
    %v777 = vlaneseq
    %v778 = vshrl.u32 %v777, 7
    %v779 = vsub.s32 0, %v778
    %v780 = vrot.slane %v775, %v779
    %782 = vbcast.lane.b32.xlu0 %v780, 256
    %v783 = vpop.permute.xlu0 %782
    %s785 = sor.u32 256, 8
    %786 = vbcast.lane.b32.xlu0 %v780, %s785
    %v787 = vpop.permute.xlu0 %786
    %v788 = vlaneseq
    %v789 = vshrl.u32 %v788, 7
    %v790 = vsub.s32 1, %v789
    %v791 = vrot.slane %v775, %v790
    %793 = vbcast.lane.b32.xlu0 %v791, 256
    %v794 = vpop.permute.xlu0 %793
    %s796 = sor.u32 256, 8
    %797 = vbcast.lane.b32.xlu0 %v791, %s796
    %v798 = vpop.permute.xlu0 %797
    %v799 = vlaneseq
    %v800 = vshrl.u32 %v799, 7
    %v801 = vsub.s32 2, %v800
    %v802 = vrot.slane %v775, %v801
    %804 = vbcast.lane.b32.xlu0 %v802, 256
    %v805 = vpop.permute.xlu0 %804
    %s807 = sor.u32 256, 8
    %808 = vbcast.lane.b32.xlu0 %v802, %s807
    %v809 = vpop.permute.xlu0 %808
    %v810 = vlaneseq
    %v811 = vshrl.u32 %v810, 7
    %v812 = vsub.s32 3, %v811
    %v813 = vrot.slane %v775, %v812
    %815 = vbcast.lane.b32.xlu0 %v813, 256
    %v816 = vpop.permute.xlu0 %815
    %s818 = sor.u32 256, 8
    %819 = vbcast.lane.b32.xlu0 %v813, %s818
    %v820 = vpop.permute.xlu0 %819
    %v821 = vlaneseq
    %v822 = vshrl.u32 %v821, 7
    %v823 = vsub.s32 4, %v822
    %v824 = vrot.slane %v775, %v823
    %826 = vbcast.lane.b32.xlu0 %v824, 256
    %v827 = vpop.permute.xlu0 %826
    %s829 = sor.u32 256, 8
    %830 = vbcast.lane.b32.xlu0 %v824, %s829
    %v831 = vpop.permute.xlu0 %830
    %v832 = vlaneseq
    %v833 = vshrl.u32 %v832, 7
    %v834 = vsub.s32 5, %v833
    %v835 = vrot.slane %v775, %v834
    %837 = vbcast.lane.b32.xlu0 %v835, 256
    %v838 = vpop.permute.xlu0 %837
    %s840 = sor.u32 256, 8
    %841 = vbcast.lane.b32.xlu0 %v835, %s840
    %v842 = vpop.permute.xlu0 %841
    %v843 = vlaneseq
    %v844 = vshrl.u32 %v843, 7
    %v845 = vsub.s32 6, %v844
    %v846 = vrot.slane %v775, %v845
    %848 = vbcast.lane.b32.xlu0 %v846, 256
    %v849 = vpop.permute.xlu0 %848
    %s851 = sor.u32 256, 8
    %852 = vbcast.lane.b32.xlu0 %v846, %s851
    %v853 = vpop.permute.xlu0 %852
    %v854 = vlaneseq
    %v855 = vshrl.u32 %v854, 7
    %v856 = vsub.s32 7, %v855
    %v857 = vrot.slane %v775, %v856
    %859 = vbcast.lane.b32.xlu0 %v857, 256
    %v860 = vpop.permute.xlu0 %859
    %s862 = sor.u32 256, 8
    %863 = vbcast.lane.b32.xlu0 %v857, %s862
    %v864 = vpop.permute.xlu0 %863
    %v865 = vlaneseq
    %v866 = vshrl.u32 %v865, 7
    %v867 = vsub.s32 0, %v866
    %v868 = vrot.slane %v776, %v867
    %870 = vbcast.lane.b32.xlu0 %v868, 256
    %v871 = vpop.permute.xlu0 %870
    %s873 = sor.u32 256, 8
    %874 = vbcast.lane.b32.xlu0 %v868, %s873
    %v875 = vpop.permute.xlu0 %874
    %v876 = vlaneseq
    %v877 = vshrl.u32 %v876, 7
    %v878 = vsub.s32 1, %v877
    %v879 = vrot.slane %v776, %v878
    %881 = vbcast.lane.b32.xlu0 %v879, 256
    %v882 = vpop.permute.xlu0 %881
    %s884 = sor.u32 256, 8
    %885 = vbcast.lane.b32.xlu0 %v879, %s884
    %v886 = vpop.permute.xlu0 %885
    %v887 = vlaneseq
    %v888 = vshrl.u32 %v887, 7
    %v889 = vsub.s32 2, %v888
    %v890 = vrot.slane %v776, %v889
    %892 = vbcast.lane.b32.xlu0 %v890, 256
    %v893 = vpop.permute.xlu0 %892
    %s895 = sor.u32 256, 8
    %896 = vbcast.lane.b32.xlu0 %v890, %s895
    %v897 = vpop.permute.xlu0 %896
    %v898 = vlaneseq
    %v899 = vshrl.u32 %v898, 7
    %v900 = vsub.s32 3, %v899
    %v901 = vrot.slane %v776, %v900
    %903 = vbcast.lane.b32.xlu0 %v901, 256
    %v904 = vpop.permute.xlu0 %903
    %s906 = sor.u32 256, 8
    %907 = vbcast.lane.b32.xlu0 %v901, %s906
    %v908 = vpop.permute.xlu0 %907
    %v909 = vlaneseq
    %v910 = vshrl.u32 %v909, 7
    %v911 = vsub.s32 4, %v910
    %v912 = vrot.slane %v776, %v911
    %914 = vbcast.lane.b32.xlu0 %v912, 256
    %v915 = vpop.permute.xlu0 %914
    %s917 = sor.u32 256, 8
    %918 = vbcast.lane.b32.xlu0 %v912, %s917
    %v919 = vpop.permute.xlu0 %918
    %v920 = vlaneseq
    %v921 = vshrl.u32 %v920, 7
    %v922 = vsub.s32 5, %v921
    %v923 = vrot.slane %v776, %v922
    %925 = vbcast.lane.b32.xlu0 %v923, 256
    %v926 = vpop.permute.xlu0 %925
    %s928 = sor.u32 256, 8
    %929 = vbcast.lane.b32.xlu0 %v923, %s928
    %v930 = vpop.permute.xlu0 %929
    %v931 = vlaneseq
    %v932 = vshrl.u32 %v931, 7
    %v933 = vsub.s32 6, %v932
    %v934 = vrot.slane %v776, %v933
    %936 = vbcast.lane.b32.xlu0 %v934, 256
    %v937 = vpop.permute.xlu0 %936
    %s939 = sor.u32 256, 8
    %940 = vbcast.lane.b32.xlu0 %v934, %s939
    %v941 = vpop.permute.xlu0 %940
    %v942 = vlaneseq
    %v943 = vshrl.u32 %v942, 7
    %v944 = vsub.s32 7, %v943
    %v945 = vrot.slane %v776, %v944
    %947 = vbcast.lane.b32.xlu0 %v945, 256
    %v948 = vpop.permute.xlu0 %947
    %s950 = sor.u32 256, 8
    %951 = vbcast.lane.b32.xlu0 %v945, %s950
    %v952 = vpop.permute.xlu0 %951
    %v953 = vadd.f32 %v56, %v783
    %v954 = vadd.f32 %v57, %v787
    %v955 = vadd.f32 %v56, %v794
    %v956 = vadd.f32 %v57, %v798
    %v957 = vadd.f32 %v56, %v805
    %v958 = vadd.f32 %v57, %v809
    %v959 = vadd.f32 %v56, %v816
    %v960 = vadd.f32 %v57, %v820
    %v961 = vadd.f32 %v56, %v827
    %v962 = vadd.f32 %v57, %v831
    %v963 = vadd.f32 %v56, %v838
    %v964 = vadd.f32 %v57, %v842
    %v965 = vadd.f32 %v56, %v849
    %v966 = vadd.f32 %v57, %v853
    %v967 = vadd.f32 %v56, %v860
    %v968 = vadd.f32 %v57, %v864
    %v969 = vadd.f32 %v56, %v871
    %v970 = vadd.f32 %v57, %v875
    %v971 = vadd.f32 %v56, %v882
    %v972 = vadd.f32 %v57, %v886
    %v973 = vadd.f32 %v56, %v893
    %v974 = vadd.f32 %v57, %v897
    %v975 = vadd.f32 %v56, %v904
    %v976 = vadd.f32 %v57, %v908
    %v977 = vadd.f32 %v56, %v915
    %v978 = vadd.f32 %v57, %v919
    %v979 = vadd.f32 %v56, %v926
    %v980 = vadd.f32 %v57, %v930
    %v981 = vadd.f32 %v56, %v937
    %v982 = vadd.f32 %v57, %v941
    %v983 = vadd.f32 %v56, %v948
    %v984 = vadd.f32 %v57, %v952
    %v985 = vsel %vm270, %v953, -inf
    %v986 = vsel %vm270, %v954, -inf
    %v987 = vmax.f32 %v985, %v986
    %v988 = vrot.slane %v987, 4
    %v989 = vmax.f32 %v987, %v988
    %v990 = vrot.slane %v989, 2
    %v991 = vmax.f32 %v989, %v990
    %v992 = vrot.slane %v991, 1
    %v993 = vmax.f32 %v991, %v992
    %v994 = vsel %vm270, %v955, -inf
    %v995 = vsel %vm270, %v956, -inf
    %v996 = vmax.f32 %v994, %v995
    %v997 = vrot.slane %v996, 4
    %v998 = vmax.f32 %v996, %v997
    %v999 = vrot.slane %v998, 2
    %v1000 = vmax.f32 %v998, %v999
    %v1001 = vrot.slane %v1000, 1
    %v1002 = vmax.f32 %v1000, %v1001
    %v1003 = vsel %vm270, %v957, -inf
    %v1004 = vsel %vm270, %v958, -inf
    %v1005 = vmax.f32 %v1003, %v1004
    %v1006 = vrot.slane %v1005, 4
    %v1007 = vmax.f32 %v1005, %v1006
    %v1008 = vrot.slane %v1007, 2
    %v1009 = vmax.f32 %v1007, %v1008
    %v1010 = vrot.slane %v1009, 1
    %v1011 = vmax.f32 %v1009, %v1010
    %v1012 = vsel %vm270, %v959, -inf
    %v1013 = vsel %vm270, %v960, -inf
    %v1014 = vmax.f32 %v1012, %v1013
    %v1015 = vrot.slane %v1014, 4
    %v1016 = vmax.f32 %v1014, %v1015
    %v1017 = vrot.slane %v1016, 2
    %v1018 = vmax.f32 %v1016, %v1017
    %v1019 = vrot.slane %v1018, 1
    %v1020 = vmax.f32 %v1018, %v1019
    %v1021 = vsel %vm270, %v961, -inf
    %v1022 = vsel %vm270, %v962, -inf
    %v1023 = vmax.f32 %v1021, %v1022
    %v1024 = vrot.slane %v1023, 4
    %v1025 = vmax.f32 %v1023, %v1024
    %v1026 = vrot.slane %v1025, 2
    %v1027 = vmax.f32 %v1025, %v1026
    %v1028 = vrot.slane %v1027, 1
    %v1029 = vmax.f32 %v1027, %v1028
    %v1030 = vsel %vm270, %v963, -inf
    %v1031 = vsel %vm270, %v964, -inf
    %v1032 = vmax.f32 %v1030, %v1031
    %v1033 = vrot.slane %v1032, 4
    %v1034 = vmax.f32 %v1032, %v1033
    %v1035 = vrot.slane %v1034, 2
    %v1036 = vmax.f32 %v1034, %v1035
    %v1037 = vrot.slane %v1036, 1
    %v1038 = vmax.f32 %v1036, %v1037
    %v1039 = vsel %vm270, %v965, -inf
    %v1040 = vsel %vm270, %v966, -inf
    %v1041 = vmax.f32 %v1039, %v1040
    %v1042 = vrot.slane %v1041, 4
    %v1043 = vmax.f32 %v1041, %v1042
    %v1044 = vrot.slane %v1043, 2
    %v1045 = vmax.f32 %v1043, %v1044
    %v1046 = vrot.slane %v1045, 1
    %v1047 = vmax.f32 %v1045, %v1046
    %v1048 = vsel %vm270, %v967, -inf
    %v1049 = vsel %vm270, %v968, -inf
    %v1050 = vmax.f32 %v1048, %v1049
    %v1051 = vrot.slane %v1050, 4
    %v1052 = vmax.f32 %v1050, %v1051
    %v1053 = vrot.slane %v1052, 2
    %v1054 = vmax.f32 %v1052, %v1053
    %v1055 = vrot.slane %v1054, 1
    %v1056 = vmax.f32 %v1054, %v1055
    %v1057 = vsel %vm270, %v969, -inf
    %v1058 = vsel %vm270, %v970, -inf
    %v1059 = vmax.f32 %v1057, %v1058
    %v1060 = vrot.slane %v1059, 4
    %v1061 = vmax.f32 %v1059, %v1060
    %v1062 = vrot.slane %v1061, 2
    %v1063 = vmax.f32 %v1061, %v1062
    %v1064 = vrot.slane %v1063, 1
    %v1065 = vmax.f32 %v1063, %v1064
    %v1066 = vsel %vm270, %v971, -inf
    %v1067 = vsel %vm270, %v972, -inf
    %v1068 = vmax.f32 %v1066, %v1067
    %v1069 = vrot.slane %v1068, 4
    %v1070 = vmax.f32 %v1068, %v1069
    %v1071 = vrot.slane %v1070, 2
    %v1072 = vmax.f32 %v1070, %v1071
    %v1073 = vrot.slane %v1072, 1
    %v1074 = vmax.f32 %v1072, %v1073
    %v1075 = vsel %vm270, %v973, -inf
    %v1076 = vsel %vm270, %v974, -inf
    %v1077 = vmax.f32 %v1075, %v1076
    %v1078 = vrot.slane %v1077, 4
    %v1079 = vmax.f32 %v1077, %v1078
    %v1080 = vrot.slane %v1079, 2
    %v1081 = vmax.f32 %v1079, %v1080
    %v1082 = vrot.slane %v1081, 1
    %v1083 = vmax.f32 %v1081, %v1082
    %v1084 = vsel %vm270, %v975, -inf
    %v1085 = vsel %vm270, %v976, -inf
    %v1086 = vmax.f32 %v1084, %v1085
    %v1087 = vrot.slane %v1086, 4
    %v1088 = vmax.f32 %v1086, %v1087
    %v1089 = vrot.slane %v1088, 2
    %v1090 = vmax.f32 %v1088, %v1089
    %v1091 = vrot.slane %v1090, 1
    %v1092 = vmax.f32 %v1090, %v1091
    %v1093 = vsel %vm270, %v977, -inf
    %v1094 = vsel %vm270, %v978, -inf
    %v1095 = vmax.f32 %v1093, %v1094
    %v1096 = vrot.slane %v1095, 4
    %v1097 = vmax.f32 %v1095, %v1096
    %v1098 = vrot.slane %v1097, 2
    %v1099 = vmax.f32 %v1097, %v1098
    %v1100 = vrot.slane %v1099, 1
    %v1101 = vmax.f32 %v1099, %v1100
    %v1102 = vsel %vm270, %v979, -inf
    %v1103 = vsel %vm270, %v980, -inf
    %v1104 = vmax.f32 %v1102, %v1103
    %v1105 = vrot.slane %v1104, 4
    %v1106 = vmax.f32 %v1104, %v1105
    %v1107 = vrot.slane %v1106, 2
    %v1108 = vmax.f32 %v1106, %v1107
    %v1109 = vrot.slane %v1108, 1
    %v1110 = vmax.f32 %v1108, %v1109
    %v1111 = vsel %vm270, %v981, -inf
    %v1112 = vsel %vm270, %v982, -inf
    %v1113 = vmax.f32 %v1111, %v1112
    %v1114 = vrot.slane %v1113, 4
    %v1115 = vmax.f32 %v1113, %v1114
    %v1116 = vrot.slane %v1115, 2
    %v1117 = vmax.f32 %v1115, %v1116
    %v1118 = vrot.slane %v1117, 1
    %v1119 = vmax.f32 %v1117, %v1118
    %v1120 = vsel %vm270, %v983, -inf
    %v1121 = vsel %vm270, %v984, -inf
    %v1122 = vmax.f32 %v1120, %v1121
    %v1123 = vrot.slane %v1122, 4
    %v1124 = vmax.f32 %v1122, %v1123
    %v1125 = vrot.slane %v1124, 2
    %v1126 = vmax.f32 %v1124, %v1125
    %v1127 = vrot.slane %v1126, 1
    %v1128 = vmax.f32 %v1126, %v1127
    %p1129 = scmp.eq.s32.totalorder 0, 0
    // Predicated region
    $region26: #{tpu_custom_call.1} parent=1 // pred_check
      %p1130 = pneg %p1129
    $region27: #{tpu_custom_call.1} parent=1 // pred_check_branch
      %1132 = sbr.rel (%p1130) target = $region29
    $region28: #{tpu_custom_call.1} parent=1 // pred_region
      %vm1149 = vcmask 1041409
      %v1150 = vsel %vm1149, %v288, %v279
      %vm1151 = vcmask 1042434
      %v1152 = vsel %vm1151, %v297, %v1150
      %vm1153 = vcmask 1043459
      %v1154 = vsel %vm1153, %v306, %v1152
      %vm1155 = vcmask 1044484
      %v1156 = vsel %vm1155, %v315, %v1154
      %vm1157 = vcmask 1045509
      %v1158 = vsel %vm1157, %v324, %v1156
      %vm1159 = vcmask 1046534
      %v1160 = vsel %vm1159, %v333, %v1158
      %vm1161 = vcmask 1047559
      %v1162 = vsel %vm1161, %v342, %v1160
      %v1163 = vsel %vm1149, %v360, %v351
      %v1164 = vsel %vm1151, %v369, %v1163
      %v1165 = vsel %vm1153, %v378, %v1164
      %v1166 = vsel %vm1155, %v387, %v1165
      %v1167 = vsel %vm1157, %v396, %v1166
      %v1168 = vsel %vm1159, %v405, %v1167
      %v1169 = vsel %vm1161, %v414, %v1168
      %1172 = vst.msk [vmem:[#allocation2] sm:$0xff] %vm270, %v1162
      %1173 = vst.msk [vmem:[#allocation2 + $0x8] sm:$0xff] %vm270, %v1169
      %v1190 = vsel %vm1149, %v645, %v636
      %v1191 = vsel %vm1151, %v654, %v1190
      %v1192 = vsel %vm1153, %v663, %v1191
      %v1193 = vsel %vm1155, %v672, %v1192
      %v1194 = vsel %vm1157, %v681, %v1193
      %v1195 = vsel %vm1159, %v690, %v1194
      %v1196 = vsel %vm1161, %v699, %v1195
      %v1197 = vsel %vm1149, %v717, %v708
      %v1198 = vsel %vm1151, %v726, %v1197
      %v1199 = vsel %vm1153, %v735, %v1198
      %v1200 = vsel %vm1155, %v744, %v1199
      %v1201 = vsel %vm1157, %v753, %v1200
      %v1202 = vsel %vm1159, %v762, %v1201
      %v1203 = vsel %vm1161, %v771, %v1202
      %s1206 = scalar_lea.vmem [#allocation2], 16
      %1207 = vst.msk [vmem:[%s1206] sm:$0xff] %vm270, %v1196
      %1208 = vst.msk [vmem:[%s1206 + $0x8] sm:$0xff] %vm270, %v1203
      %v1225 = vsel %vm1149, %v1002, %v993
      %v1226 = vsel %vm1151, %v1011, %v1225
      %v1227 = vsel %vm1153, %v1020, %v1226
      %v1228 = vsel %vm1155, %v1029, %v1227
      %v1229 = vsel %vm1157, %v1038, %v1228
      %v1230 = vsel %vm1159, %v1047, %v1229
      %v1231 = vsel %vm1161, %v1056, %v1230
      %v1232 = vsel %vm1149, %v1074, %v1065
      %v1233 = vsel %vm1151, %v1083, %v1232
      %v1234 = vsel %vm1153, %v1092, %v1233
      %v1235 = vsel %vm1155, %v1101, %v1234
      %v1236 = vsel %vm1157, %v1110, %v1235
      %v1237 = vsel %vm1159, %v1119, %v1236
      %v1238 = vsel %vm1161, %v1128, %v1237
      %s1241 = scalar_lea.vmem [#allocation2], 32
      %1242 = vst.msk [vmem:[%s1241] sm:$0xff] %vm270, %v1231
      %1243 = vst.msk [vmem:[%s1241 + $0x8] sm:$0xff] %vm270, %v1238
    $region29: #{tpu_custom_call.1} parent=1 // pred_fallthru
      _
    %p1244 = scmp.gt.s32.totalorder 0, 0
    // Predicated region
    $region30: #{tpu_custom_call.1} parent=1 // pred_check
      %p1245 = pneg %p1244
    $region31: #{tpu_custom_call.1} parent=1 // pred_check_branch
      %1247 = sbr.rel (%p1245) target = $region33
    $region32: #{tpu_custom_call.1} parent=1 // pred_region
      %v1248 = vld [vmem:[#allocation2] sm:$0xff]
      %v1249 = vld [vmem:[#allocation2 + $0x8] sm:$0xff]
      %vm1266 = vcmask 1041409
      %v1267 = vsel %vm1266, %v288, %v279
      %vm1268 = vcmask 1042434
      %v1269 = vsel %vm1268, %v297, %v1267
      %vm1270 = vcmask 1043459
      %v1271 = vsel %vm1270, %v306, %v1269
      %vm1272 = vcmask 1044484
      %v1273 = vsel %vm1272, %v315, %v1271
      %vm1274 = vcmask 1045509
      %v1275 = vsel %vm1274, %v324, %v1273
      %vm1276 = vcmask 1046534
      %v1277 = vsel %vm1276, %v333, %v1275
      %vm1278 = vcmask 1047559
      %v1279 = vsel %vm1278, %v342, %v1277
      %v1280 = vsel %vm1266, %v360, %v351
      %v1281 = vsel %vm1268, %v369, %v1280
      %v1282 = vsel %vm1270, %v378, %v1281
      %v1283 = vsel %vm1272, %v387, %v1282
      %v1284 = vsel %vm1274, %v396, %v1283
      %v1285 = vsel %vm1276, %v405, %v1284
      %v1286 = vsel %vm1278, %v414, %v1285
      %v1289 = vmax.f32 %v1248, %v1279
      %v1290 = vmax.f32 %v1249, %v1286
      %1291 = vst.msk [vmem:[#allocation2] sm:$0xff] %vm270, %v1289
      %1292 = vst.msk [vmem:[#allocation2 + $0x8] sm:$0xff] %vm270, %v1290
      %s1293 = scalar_lea.vmem [#allocation2], 16
      %v1294 = vld [vmem:[%s1293] sm:$0xff]
      %v1295 = vld [vmem:[%s1293 + $0x8] sm:$0xff]
      %v1312 = vsel %vm1266, %v645, %v636
      %v1313 = vsel %vm1268, %v654, %v1312
      %v1314 = vsel %vm1270, %v663, %v1313
      %v1315 = vsel %vm1272, %v672, %v1314
      %v1316 = vsel %vm1274, %v681, %v1315
      %v1317 = vsel %vm1276, %v690, %v1316
      %v1318 = vsel %vm1278, %v699, %v1317
      %v1319 = vsel %vm1266, %v717, %v708
      %v1320 = vsel %vm1268, %v726, %v1319
      %v1321 = vsel %vm1270, %v735, %v1320
      %v1322 = vsel %vm1272, %v744, %v1321
      %v1323 = vsel %vm1274, %v753, %v1322
      %v1324 = vsel %vm1276, %v762, %v1323
      %v1325 = vsel %vm1278, %v771, %v1324
      %v1328 = vmax.f32 %v1294, %v1318
      %v1329 = vmax.f32 %v1295, %v1325
      %1330 = vst.msk [vmem:[%s1293] sm:$0xff] %vm270, %v1328
      %1331 = vst.msk [vmem:[%s1293 + $0x8] sm:$0xff] %vm270, %v1329
      %s1332 = scalar_lea.vmem [#allocation2], 32
      %v1333 = vld [vmem:[%s1332] sm:$0xff]
      %v1334 = vld [vmem:[%s1332 + $0x8] sm:$0xff]
      %v1351 = vsel %vm1266, %v1002, %v993
      %v1352 = vsel %vm1268, %v1011, %v1351
      %v1353 = vsel %vm1270, %v1020, %v1352
      %v1354 = vsel %vm1272, %v1029, %v1353
      %v1355 = vsel %vm1274, %v1038, %v1354
      %v1356 = vsel %vm1276, %v1047, %v1355
      %v1357 = vsel %vm1278, %v1056, %v1356
      %v1358 = vsel %vm1266, %v1074, %v1065
      %v1359 = vsel %vm1268, %v1083, %v1358
      %v1360 = vsel %vm1270, %v1092, %v1359
      %v1361 = vsel %vm1272, %v1101, %v1360
      %v1362 = vsel %vm1274, %v1110, %v1361
      %v1363 = vsel %vm1276, %v1119, %v1362
      %v1364 = vsel %vm1278, %v1128, %v1363
      %v1367 = vmax.f32 %v1333, %v1357
      %v1368 = vmax.f32 %v1334, %v1364
      %1369 = vst.msk [vmem:[%s1332] sm:$0xff] %vm270, %v1367
      %1370 = vst.msk [vmem:[%s1332 + $0x8] sm:$0xff] %vm270, %v1368
    $region33: #{tpu_custom_call.1} parent=1 // pred_fallthru
      _
    // Predicated region
    $region34: #{tpu_custom_call.1} parent=1 // pred_check
      %p1371 = pneg %p1129
    $region35: #{tpu_custom_call.1} parent=1 // pred_check_branch
      %1373 = sbr.rel (%p1371) target = $region37
    $region36: #{tpu_custom_call.1} parent=1 // pred_region
      %v1374 = vld [vmem:[#allocation3] sm:$0xff]
      %v1375 = vld [vmem:[#allocation3 + $0x8] sm:$0xff]
      %v1376 = vld [vmem:[#allocation2] sm:$0xff]
      %v1377 = vld [vmem:[#allocation2 + $0x8] sm:$0xff]
      %vm1378 = vcmp.eq.f32.partialorder %v1376, -inf
      %vm1379 = vcmp.eq.f32.partialorder %v1377, -inf
      %v1380 = vsel %vm1378, 0.0, %v1376
      %v1381 = vsel %vm1379, 0.0, %v1377
      %s1382 = scalar_lea.vmem [#allocation2], 16
      %v1383 = vld [vmem:[%s1382] sm:$0xff]
      %v1384 = vld [vmem:[%s1382 + $0x8] sm:$0xff]
      %vm1385 = vcmp.eq.f32.partialorder %v1383, -inf
      %vm1386 = vcmp.eq.f32.partialorder %v1384, -inf
      %v1387 = vsel %vm1385, 0.0, %v1383
      %v1388 = vsel %vm1386, 0.0, %v1384
      %s1389 = scalar_lea.vmem [#allocation2], 32
      %v1390 = vld [vmem:[%s1389] sm:$0xff]
      %v1391 = vld [vmem:[%s1389 + $0x8] sm:$0xff]
      %vm1392 = vcmp.eq.f32.partialorder %v1390, -inf
      %vm1393 = vcmp.eq.f32.partialorder %v1391, -inf
      %v1394 = vsel %vm1392, 0.0, %v1390
      %v1395 = vsel %vm1393, 0.0, %v1391
      %1398 = vrot.lane.b32.xlu0 %v1380, 32
      %v1399 = vpop.permute.xlu0 %1398
      %1400 = vrot.lane.b32.xlu0 %v1381, 32
      %v1401 = vpop.permute.xlu0 %1400
      %1406 = vrot.lane.b32.xlu0 %v1387, 64
      %v1407 = vpop.permute.xlu0 %1406
      %1408 = vrot.lane.b32.xlu0 %v1388, 64
      %v1409 = vpop.permute.xlu0 %1408
      %1414 = vrot.lane.b32.xlu0 %v1394, 96
      %v1415 = vpop.permute.xlu0 %1414
      %1416 = vrot.lane.b32.xlu0 %v1395, 96
      %v1417 = vpop.permute.xlu0 %1416
      %v1420 = vsel %vm270, %v1374, %v1399
      %v1421 = vsel %vm270, %v1375, %v1401
      %vm1422 = vcmask 523264
      %v1423 = vsel %vm1422, %v1420, %v1407
      %v1424 = vsel %vm1422, %v1421, %v1409
      %vm1425 = vcmask 785408
      %v1426 = vsel %vm1425, %v1423, %v1415
      %v1427 = vsel %vm1425, %v1424, %v1417
      %1428 = vst [vmem:[#allocation9] sm:$0xff] %v1426
      %1429 = vst [vmem:[#allocation9 + $0x8] sm:$0xff] %v1427
    $region37: #{tpu_custom_call.1} parent=1 // pred_fallthru
      _
    // Predicated region
    $region38: #{tpu_custom_call.1} parent=1 // pred_check
      _
    $region39: #{tpu_custom_call.1} parent=1 // pred_check_branch
      %1431 = sbr.rel (0) target = $region41
    $region40: #{tpu_custom_call.1} parent=1 // pred_region
      %s1433 = ssub.s32 256, 256
      %1434 = vsyncadd [#allocation5], %s1433
      %s1435 = sshll.u32 [#allocation9], 4
      %s1436 = int_to_ptr.vmem [resolvable:$true] %s1435
      %1441 = dma.vmem_to_hbm [thread:$0]  %s1436, 256, %s3, [#allocation5], 128, 128, 8
    $region41: #{tpu_custom_call.1} parent=1 // pred_fallthru
      _
    // Predicated region
    $region42: #{tpu_custom_call.1} parent=1 // pred_check
      _
    $region43: #{tpu_custom_call.1} parent=1 // pred_check_branch
      %1443 = sbr.rel (0) target = $region45
    $region44: #{tpu_custom_call.1} parent=1 // pred_region
      %1444 = dma.done [#allocation5], 256
    $region45: #{tpu_custom_call.1} parent=1 // pred_fallthru
      _
    %1445 = vsyncpa [#allocation4], 1
    %1446 = vsyncpa [#allocation7], 1
    %1447 = vsyncpa [#allocation5], 1

</llo_original>
